<compile_context>
chip_gen: v6e
topology: v6e:2x2x1
jax: 0.10.0
libtpu: 0.0.40
codegen_flags: <defaults>
</compile_context>

<pallas_src>
import functools

import jax
import jax.numpy as jnp
from jax.experimental import pallas as pl
from jax.experimental.pallas import tpu as pltpu

HIDDEN = 64            # per-head hidden width
FUSED = 2 * HIDDEN     # fused lane width (action | value)
U_LANES = 2 * FUSED    # dropout randoms per row (2 dropout layers x 128 lanes)
U_SCALE = 128.0        # int8 uniforms take values 0..127


def _round_up(x, m):
    return ((x + m - 1) // m) * m


# ---------------------------------------------------------------------------
# Kernel bodies
# ---------------------------------------------------------------------------
def _activation(h, act_func):
    if act_func == "tanh":
        return jnp.tanh(h)
    if act_func == "relu":
        return jnp.maximum(h, 0.0)
    # TODO(synk): 'maxout' / 'lwta' not implemented (source not provided).
    raise NotImplementedError(act_func)


def _forward_body(x, w_ref, aux_ref, act_func, drop_fn):
    """Shared fused forward: returns the (bb, 128) output slab (f32)."""
    ni = w_ref.shape[0] - FUSED

    # layer 1 (a_fc1 | v_fc1 fused): bf16 x @ bf16 w -> f32 accumulate
    h = jnp.dot(x, w_ref[0:ni, :], preferred_element_type=jnp.float32)
    h = h + aux_ref[0:1, :]
    h = drop_fn(_activation(h, act_func), 0)

    # layer 2 (block-diagonal a_fc2 / v_fc2): f32 h @ (bf16->f32) w
    w2 = w_ref[ni:ni + FUSED, :].astype(jnp.float32)
    h = jnp.dot(h, w2, preferred_element_type=jnp.float32) + aux_ref[1:2, :]
    h = drop_fn(_activation(h, act_func), 1)

    # v_fc3 ([64 -> 1]) as VPU multiply + cross-lane reduce (weights on cols
    # 64..127 of aux row 2; action cols multiplied by zeros).
    value = jnp.sum(h * aux_ref[2:3, :], axis=-1, keepdims=True) + aux_ref[3:4, 0:1]

    # lane-dense merge: cols 0..63 = action features, 64..127 = value (bcast).
    lane = jax.lax.broadcasted_iota(jnp.int32, (1, FUSED), 1)   # (1,128) mask
    return jnp.where(lane < HIDDEN, h, value)


def _mlp_policy_kernel_eval(x_ref, w_ref, aux_ref, out_ref, *, act_func):
    out = _forward_body(x_ref[...], w_ref, aux_ref, act_func,
                        drop_fn=lambda h, layer: h)
    out_ref[...] = out.astype(out_ref.dtype)


def _mlp_policy_kernel_train(dp_ref, x_ref, u_ref, w_ref, aux_ref, out_ref, *,
                             act_func):
    thresh = dp_ref[0]   # p * 128  (int8 uniform threshold)
    scale = dp_ref[1]    # 1 / (1 - p)

    def drop_fn(h, layer):
        u = u_ref[:, layer * FUSED:(layer + 1) * FUSED].astype(jnp.float32)
        # keep with prob ~(1-p), scale kept elements; p==0 -> exact identity.
        return h * jnp.where(u >= thresh, scale, jnp.float32(0.0))

    out = _forward_body(x_ref[...], w_ref, aux_ref, act_func, drop_fn)
    out_ref[...] = out.astype(out_ref.dtype)


# ---------------------------------------------------------------------------
# Parameter init (matches weights_init_mlp: N(0,1) rows, L2-row-normalized,
# zero bias).  Weights stored torch-style [out, in].
# ---------------------------------------------------------------------------
def init_linear(key, in_features, out_features):
    w = jax.random.normal(key, (out_features, in_features), dtype=jnp.float32)
    w = w / jnp.sqrt(jnp.sum(w * w, axis=1, keepdims=True))
    b = jnp.zeros((out_features,), jnp.float32)
    return w, b


def init_mlp_policy_params(key, num_inputs, hidden=HIDDEN):
    ks = jax.random.split(key, 5)
    return {
        "v_fc1": init_linear(ks[0], num_inputs, hidden),
        "v_fc2": init_linear(ks[1], hidden, hidden),
        "v_fc3": init_linear(ks[2], hidden, 1),
        "a_fc1": init_linear(ks[3], num_inputs, hidden),
        "a_fc2": init_linear(ks[4], hidden, hidden),
    }


def pack_mlp_policy_params(params, weight_dtype=jnp.bfloat16):
    """One-time packing into kernel-ready slabs (do NOT call per forward)."""
    wv1, bv1 = params["v_fc1"]
    wv2, bv2 = params["v_fc2"]
    wv3, bv3 = params["v_fc3"]
    wa1, ba1 = params["a_fc1"]
    wa2, ba2 = params["a_fc2"]
    ni = wv1.shape[1]
    ni_pad = _round_up(ni, 16)   # multiple of 16: clean bf16 sublane packing
    H = HIDDEN

    # fused layer-1 weight [NI_pad, 128]: cols 0..63 action head, 64..127 value
    w1 = jnp.concatenate([wa1.T, wv1.T], axis=1)
    w1 = jnp.pad(w1, ((0, ni_pad - ni), (0, 0)))
    # block-diagonal layer-2 weight [128, 128]
    w2 = jnp.zeros((2 * H, 2 * H), jnp.float32)
    w2 = w2.at[:H, :H].set(wa2.T).at[H:, H:].set(wv2.T)
    w_slab = jnp.concatenate([w1, w2], axis=0).astype(weight_dtype)

    aux = jnp.zeros((8, FUSED), jnp.float32)     # biases / v_fc3 stay f32
    aux = aux.at[0, :].set(jnp.concatenate([ba1, bv1]))
    aux = aux.at[1, :].set(jnp.concatenate([ba2, bv2]))
    aux = aux.at[2, H:].set(wv3[0])              # v_fc3 row (value cols)
    aux = aux.at[3, 0].set(bv3[0])               # v_fc3 bias
    return w_slab, aux


# ---------------------------------------------------------------------------
# Wrapper
# ---------------------------------------------------------------------------
def _static_scalar(v):
    try:
        return float(v)
    except Exception:
        return None   # traced value


def _pick_batch_tile(B):
    # Single block for small batches; for large batches split into >= 2 blocks
    # (so ("parallel",) shards across both v7x TensorCores), multiples of 256
    # (whole layout tiles for int8/bf16/f32 operands), capped at 2048 rows.
    if B <= 256:
        return B
    return min(2048, _round_up(pl.cdiv(B, 2), 256))


def mlp_policy_forward(inputs, states, masks, packed_params, *,
                       drop, counter, num_updates, key=None, act_func="tanh"):
    w_slab, aux = packed_params
    B, ni = inputs.shape
    ni_pad = w_slab.shape[0] - FUSED

    x = inputs.astype(w_slab.dtype)
    if ni != ni_pad:
        x = jnp.pad(x, ((0, 0), (0, ni_pad - ni)))

    bb = _pick_batch_tile(B)
    grid = (pl.cdiv(B, bb),)

    x_spec = pl.BlockSpec((bb, ni_pad), lambda i: (i, 0))
    w_spec = pl.BlockSpec((ni_pad + FUSED, FUSED), lambda i: (0, 0))
    aux_spec = pl.BlockSpec((8, FUSED), lambda i: (0, 0))
    out_spec = pl.BlockSpec((bb, FUSED), lambda i: (i, 0))
    out_shape = jax.ShapeDtypeStruct((B, FUSED), jnp.bfloat16)
    cparams = pltpu.CompilerParams(dimension_semantics=("parallel",))

    # Static eval dispatch: if counter/drop are known at trace time and imply
    # p == 0, use the dropout-free kernel (no `u` operand, no mask passes).
    c_stat, d_stat = _static_scalar(counter), _static_scalar(drop)
    static_no_dropout = (c_stat is not None and d_stat is not None
                         and (c_stat <= 0.0 or d_stat == 0.0))

    if static_no_dropout:
        kernel = functools.partial(_mlp_policy_kernel_eval, act_func=act_func)
        out = pl.pallas_call(
            kernel,
            out_shape=out_shape,
            grid=grid,
            in_specs=[x_spec, w_spec, aux_spec],
            out_specs=out_spec,
            compiler_params=cparams,
        )(x, w_slab, aux)
    else:
        # decay schedule exactly as in MLPPolicy.forward -- runtime scalars so
        # changing `counter` never recompiles the kernel.
        c = jnp.asarray(counter, jnp.float32)
        decay = jnp.where(c < 0, jnp.float32(0.0),
                          c / jnp.asarray(num_updates, jnp.float32))
        p = jnp.clip(jnp.asarray(drop, jnp.float32) * decay, 0.0, 1.0)
        scale = jnp.where(p < 1.0,
                          1.0 / jnp.maximum(1.0 - p, jnp.float32(1e-12)),
                          jnp.float32(0.0))
        dp = jnp.stack([p * jnp.float32(U_SCALE), scale])

        if key is None:
            key = jax.random.PRNGKey(0)
        # int8 uniform thresholds in [0,128): 4x fewer HBM bytes than f32
        # uniforms (dropout prob quantized to 1/128 -- negligible).
        u = jax.random.randint(key, (B, U_LANES), 0, int(U_SCALE),
                               dtype=jnp.int8)

        kernel = functools.partial(_mlp_policy_kernel_train, act_func=act_func)
        out = pl.pallas_call(
            kernel,
            out_shape=out_shape,
            grid=grid,
            in_specs=[
                pl.BlockSpec(memory_space=pltpu.MemorySpace.SMEM),      # dp
                x_spec,
                pl.BlockSpec((bb, U_LANES), lambda i: (i, 0)),          # u
                w_spec,
                aux_spec,
            ],
            out_specs=out_spec,
            compiler_params=cparams,
        )(dp, x, u, w_slab, aux)

    value = out[:, HIDDEN:HIDDEN + 1].astype(jnp.float32)
    act_feat = out[:, :HIDDEN].astype(jnp.float32)
    # states pass through untouched (state_size == 1, no recurrence).
    return value, act_feat, states


# ---------------------------------------------------------------------------
# Pure-JAX reference (no dropout), mirroring the kernel's bf16 weight/input
# precision with f32 accumulation, for the correctness check.
# ---------------------------------------------------------------------------
def reference_forward(inputs, params, act_func="tanh",
                      weight_dtype=jnp.bfloat16):
    act = jnp.tanh if act_func == "tanh" else (lambda z: jnp.maximum(z, 0.0))

    def cast(w):
        return w.astype(weight_dtype).astype(jnp.float32)

    def lin(h, name, cast_w=True):
        w, b = params[name]
        wf = cast(w) if cast_w else w
        return h @ wf.T + b

    x32 = inputs.astype(weight_dtype).astype(jnp.float32)
    v = act(lin(x32, "v_fc1"))
    v = act(lin(v, "v_fc2"))
    value = lin(v, "v_fc3", cast_w=False)        # v_fc3 stays f32 in the kernel
    a = act(lin(x32, "a_fc1"))
    a = act(lin(a, "a_fc2"))
    return value, a


# ---------------------------------------------------------------------------
# Demo
# ---------------------------------------------------------------------------
if __name__ == "__main__":
    key = jax.random.PRNGKey(0)
    k_param, k_in, k_state, k_drop = jax.random.split(key, 4)

    B = 8            # batch
    NUM_INPUTS = 32  # observation dim
    NUM_UPDATES = 10
    DROP = 0.5

    params = init_mlp_policy_params(k_param, NUM_INPUTS)
    packed = pack_mlp_policy_params(params)   # once, outside the per-call path

    inputs = jax.random.normal(k_in, (B, NUM_INPUTS), dtype=jnp.float32)
    states = jax.random.normal(k_state, (B, 1), dtype=jnp.float32)
    masks = jnp.ones((B, 1), dtype=jnp.float32)

    # --- eval path (counter < 0 -> p statically 0 -> dropout-free kernel) ---
    v0, a0, s0 = mlp_policy_forward(
        inputs, states, masks, packed,
        drop=DROP, counter=-1, num_updates=NUM_UPDATES, act_func="tanh")
    v_ref, a_ref = reference_forward(inputs, params, "tanh")
    assert v0.shape == (B, 1) and a0.shape == (B, HIDDEN)
    assert bool(jnp.allclose(v0, v_ref, rtol=1e-2, atol=1e-2)), "value mismatch"
    assert bool(jnp.allclose(a0, a_ref, rtol=1e-2, atol=1e-2)), "act-feature mismatch"

    # --- training path with dropout active (p = drop * counter/num_updates) ---
    value, act_feat, states_out = mlp_policy_forward(
        inputs, states, masks, packed,
        drop=DROP, counter=NUM_UPDATES, num_updates=NUM_UPDATES,
        key=k_drop, act_func="tanh")
    jax.block_until_ready((value, act_feat, states_out))

    assert value.shape == (B, 1)
    assert act_feat.shape == (B, HIDDEN)
    assert states_out.shape == states.shape
    print("KERNEL_OK")
</pallas_src>

<mosaic_0001>
module attributes {stable_mosaic.version = 11 : i64} {
  func.func @_mlp_policy_kernel_eval(%arg0: i32, %arg1: memref<8x32xbf16, #tpu.memory_space<vmem>>, %arg2: memref<160x128xbf16, #tpu.memory_space<vmem>>, %arg3: memref<8x128xf32, #tpu.memory_space<vmem>>, %arg4: memref<8x128xbf16, #tpu.memory_space<vmem>>) attributes {dimension_semantics = [#tpu.dimension_semantics<parallel>], iteration_bounds = array<i64: 1>, scalar_prefetch = 0 : i64, scratch_operands = 0 : i64, tpu.core_type = #tpu.core_type<tc>, window_params = [{transform_indices = @transform_0, window_bounds = array<i64: 8, 32>}, {pipeline_mode = #tpu.pipeline_mode<synchronous>, transform_indices = @transform_1, window_bounds = array<i64: 160, 128>}, {pipeline_mode = #tpu.pipeline_mode<synchronous>, transform_indices = @transform_2, window_bounds = array<i64: 8, 128>}, {transform_indices = @transform_3, window_bounds = array<i64: 8, 128>}]} {
    %c0 = arith.constant 0 : index
    %c0_0 = arith.constant 0 : index
    %0 = vector.load %arg1[%c0, %c0_0] : memref<8x32xbf16, #tpu.memory_space<vmem>>, vector<8x32xbf16>
    %c0_1 = arith.constant 0 : index
    %c0_2 = arith.constant 0 : index
    %1 = vector.load %arg2[%c0_1, %c0_2] : memref<160x128xbf16, #tpu.memory_space<vmem>>, vector<32x128xbf16>
    %cst = arith.constant dense<0.000000e+00> : vector<8x128xf32>
    %2 = tpu.matmul %0, %1, %cst {dimension_numbers = #tpu.dot_dimension_numbers<[1], [0], [0], [1], [0, 0, 1, 1], [], []>} : vector<8x32xbf16>, vector<32x128xbf16>, vector<8x128xf32> -> vector<8x128xf32>
    %c0_3 = arith.constant 0 : index
    %c0_4 = arith.constant 0 : index
    %3 = vector.load %arg3[%c0_3, %c0_4] : memref<8x128xf32, #tpu.memory_space<vmem>>, vector<1x128xf32>
    %4 = vector.broadcast %3 : vector<1x128xf32> to vector<8x128xf32>
    %5 = arith.addf %2, %4 : vector<8x128xf32>
    %6 = math.tanh %5 : vector<8x128xf32>
    %c32 = arith.constant 32 : index
    %c0_5 = arith.constant 0 : index
    %7 = vector.load %arg2[%c32, %c0_5] : memref<160x128xbf16, #tpu.memory_space<vmem>>, vector<128x128xbf16>
    %8 = arith.extf %7 : vector<128x128xbf16> to vector<128x128xf32>
    %cst_6 = arith.constant dense<0.000000e+00> : vector<8x128xf32>
    %9 = tpu.matmul %6, %8, %cst_6 {dimension_numbers = #tpu.dot_dimension_numbers<[1], [0], [0], [1], [0, 0, 1, 1], [], []>} : vector<8x128xf32>, vector<128x128xf32>, vector<8x128xf32> -> vector<8x128xf32>
    %c1 = arith.constant 1 : index
    %c0_7 = arith.constant 0 : index
    %10 = vector.load %arg3[%c1, %c0_7] : memref<8x128xf32, #tpu.memory_space<vmem>>, vector<1x128xf32>
    %11 = vector.broadcast %10 : vector<1x128xf32> to vector<8x128xf32>
    %12 = arith.addf %9, %11 : vector<8x128xf32>
    %13 = math.tanh %12 : vector<8x128xf32>
    %c2 = arith.constant 2 : index
    %c0_8 = arith.constant 0 : index
    %14 = vector.load %arg3[%c2, %c0_8] : memref<8x128xf32, #tpu.memory_space<vmem>>, vector<1x128xf32>
    %15 = vector.broadcast %14 : vector<1x128xf32> to vector<8x128xf32>
    %16 = arith.mulf %13, %15 : vector<8x128xf32>
    %cst_9 = arith.constant dense<0.000000e+00> : vector<8xf32>
    %17 = vector.multi_reduction <add>, %16, %cst_9 [1] : vector<8x128xf32> to vector<8xf32>
    %18 = vector.shape_cast %17 : vector<8xf32> to vector<8x1xf32>
    %c3 = arith.constant 3 : index
    %c0_10 = arith.constant 0 : index
    %19 = vector.load %arg3[%c3, %c0_10] : memref<8x128xf32, #tpu.memory_space<vmem>>, vector<1x1xf32>
    %20 = vector.broadcast %19 : vector<1x1xf32> to vector<8x1xf32>
    %21 = arith.addf %18, %20 : vector<8x1xf32>
    %22 = tpu.iota {dimensions = array<i32: 1>} : vector<1x128xi32>
    %c64_i32 = arith.constant 64 : i32
    %23 = vector.broadcast %c64_i32 : i32 to vector<1x128xi32>
    %24 = arith.cmpi slt, %22, %23 : vector<1x128xi32>
    %25 = vector.shape_cast %24 : vector<1x128xi1> to vector<1x128xi1>
    %26 = vector.broadcast %25 : vector<1x128xi1> to vector<8x128xi1>
    %27 = vector.shape_cast %21 : vector<8x1xf32> to vector<8x1xf32>
    %28 = vector.broadcast %27 : vector<8x1xf32> to vector<8x128xf32>
    %29 = arith.select %26, %13, %28 : vector<8x128xi1>, vector<8x128xf32>
    %30 = arith.truncf %29 : vector<8x128xf32> to vector<8x128xbf16>
    %c0_11 = arith.constant 0 : index
    %c0_12 = arith.constant 0 : index
    %31 = vector.load %arg4[%c0_11, %c0_12] : memref<8x128xbf16, #tpu.memory_space<vmem>>, vector<8x128xbf16>
    tpu.vector_store %arg4[%c0_11, %c0_12], %30 {strides = array<i32>} : memref<8x128xbf16, #tpu.memory_space<vmem>>, vector<8x128xbf16>,
    return
  }
  func.func @transform_0(%arg0: i32) -> (i32, i32) {
    %c0_i32 = arith.constant 0 : i32
    %c0_i32_0 = arith.constant 0 : i32
    return %arg0, %c0_i32 : i32, i32
  }
  func.func @transform_1(%arg0: i32) -> (i32, i32) {
    %c0_i32 = arith.constant 0 : i32
    %c0_i32_0 = arith.constant 0 : i32
    %c0_i32_1 = arith.constant 0 : i32
    return %c0_i32, %c0_i32_0 : i32, i32
  }
  func.func @transform_2(%arg0: i32) -> (i32, i32) {
    %c0_i32 = arith.constant 0 : i32
    %c0_i32_0 = arith.constant 0 : i32
    %c0_i32_1 = arith.constant 0 : i32
    return %c0_i32, %c0_i32_0 : i32, i32
  }
  func.func @transform_3(%arg0: i32) -> (i32, i32) {
    %c0_i32 = arith.constant 0 : i32
    %c0_i32_0 = arith.constant 0 : i32
    return %arg0, %c0_i32 : i32, i32
  }
}

</mosaic_0001>

<llo_original>
// kernel: tpu_custom_call.1
$region0: #{tpu_custom_call.1}
  #allocation0 [shape = 'u32[]', space=smem, size = 0x4, offset = 0x4, fixed_abs, tag = 'smem constant byte address 0x4 - core index']
  #allocation1 [shape = 'u32[144,128]{1,0:T(1,128)}', space=vmem, size = 0x12000, scoped, tag = 'internal scratch']
  %s0 = inlined_call_operand.hbm [shape: bf16[8,32], index: 0, kind: input, shape index: {}]
  %s1 = inlined_call_operand.hbm [shape: bf16[160,128], index: 1, kind: input, shape index: {}]
  %s2 = inlined_call_operand.hbm [shape: f32[8,128], index: 2, kind: input, shape index: {}]
  %s3 = inlined_call_operand.hbm [shape: bf16[8,128], index: 3, kind: output, shape index: {}]
  %s4 = sld [smem:[#allocation0]]
  $region34: #{tpu_custom_call.1} parent=0
    _
  %s6 = ssub.s32 1, %s4
  %s7 = scalar_select 0, %s6, %s4
  $region1: #{tpu_custom_call.1} parent=0
    #allocation2 [shape = 'u8[2048]{0}', space=vmem, size = 0x800, scoped, tag = 'input window, operand 0, single buffered']
    #allocation3 [shape = 's32[1]{0}', space=sflag, size = 0x4, scoped, tag = 'scoped memory for tpu_custom_call.1']
    #allocation4 [shape = 's32[1]{0}', space=sflag, size = 0x4, scoped, tag = 'scoped memory for tpu_custom_call.1']
    #allocation5 [shape = 'u8[40960]{0}', space=vmem, size = 0xa000, scoped, tag = 'input window, operand 1, single buffered']
    #allocation6 [shape = 's32[1]{0}', space=sflag, size = 0x4, scoped, tag = 'scoped memory for tpu_custom_call.1']
    #allocation7 [shape = 'u8[4096]{0}', space=vmem, size = 0x1000, scoped, tag = 'input window, operand 2, single buffered']
    #allocation8 [shape = 'u8[2048]{0}', space=vmem, size = 0x800, scoped, tag = 'output window, operand 0, single buffered']
    %8 = vsyncpa [#allocation3], 0
    %9 = vsyncpa [#allocation6], 0
    %10 = vsyncpa [#allocation4], 0
    // Predicated region
    $region2: #{tpu_custom_call.1} parent=1 // pred_check
      _
    $region3: #{tpu_custom_call.1} parent=1 // pred_check_branch
      %12 = sbr.rel (0) target = $region5
    $region4: #{tpu_custom_call.1} parent=1 // pred_region
      %s14 = ssub.s32 64, 64
      %15 = vsyncadd [#allocation3], %s14
      %s17 = sshll.u32 [#allocation2], 4
      %s18 = int_to_ptr.vmem [resolvable:$true] %s17
      %20 = dma.hbm_to_vmem [thread:$0]  %s0, 64, %s18, [#allocation3]
    $region5: #{tpu_custom_call.1} parent=1 // pred_fallthru
      _
    // Predicated region
    $region6: #{tpu_custom_call.1} parent=1 // pred_check
      _
    $region7: #{tpu_custom_call.1} parent=1 // pred_check_branch
      %22 = sbr.rel (0) target = $region9
    $region8: #{tpu_custom_call.1} parent=1 // pred_region
      %s24 = ssub.s32 1280, 1280
      %25 = vsyncadd [#allocation6], %s24
      %s26 = sshll.u32 [#allocation5], 4
      %s27 = int_to_ptr.vmem [resolvable:$true] %s26
      %32 = dma.hbm_to_vmem [thread:$0]  %s1, 1280, %s27, [#allocation6], 64, 64, 4
    $region9: #{tpu_custom_call.1} parent=1 // pred_fallthru
      _
    // Predicated region
    $region10: #{tpu_custom_call.1} parent=1 // pred_check
      _
    $region11: #{tpu_custom_call.1} parent=1 // pred_check_branch
      %34 = sbr.rel (0) target = $region13
    $region12: #{tpu_custom_call.1} parent=1 // pred_region
      %s36 = ssub.s32 128, 128
      %37 = vsyncadd [#allocation6], %s36
      %s39 = sshll.u32 [#allocation7], 4
      %s40 = int_to_ptr.vmem [resolvable:$true] %s39
      %42 = dma.hbm_to_vmem [thread:$0]  %s2, 128, %s40, [#allocation6]
    $region13: #{tpu_custom_call.1} parent=1 // pred_fallthru
      _
    // Predicated region
    $region14: #{tpu_custom_call.1} parent=1 // pred_check
      _
    $region15: #{tpu_custom_call.1} parent=1 // pred_check_branch
      %44 = sbr.rel (0) target = $region17
    $region16: #{tpu_custom_call.1} parent=1 // pred_region
      %45 = dma.done [#allocation3], 64
    $region17: #{tpu_custom_call.1} parent=1 // pred_fallthru
      _
    // Predicated region
    $region18: #{tpu_custom_call.1} parent=1 // pred_check
      _
    $region19: #{tpu_custom_call.1} parent=1 // pred_check_branch
      %47 = sbr.rel (0) target = $region21
    $region20: #{tpu_custom_call.1} parent=1 // pred_region
      %48 = dma.done [#allocation6], 1280
    $region21: #{tpu_custom_call.1} parent=1 // pred_fallthru
      _
    // Predicated region
    $region22: #{tpu_custom_call.1} parent=1 // pred_check
      _
    $region23: #{tpu_custom_call.1} parent=1 // pred_check_branch
      %50 = sbr.rel (0) target = $region25
    $region24: #{tpu_custom_call.1} parent=1 // pred_region
      %51 = dma.done [#allocation6], 128
    $region25: #{tpu_custom_call.1} parent=1 // pred_fallthru
      _
    %v53 = vld [vmem:[#allocation2] sm:$0xf]
    %v54 = vld [vmem:[#allocation5] sm:$0xf]
    %v55 = vld [vmem:[#allocation5 + $0x4] sm:$0xf]
    %v56 = vld [vmem:[#allocation5 + $0x8] sm:$0xf]
    %v57 = vld [vmem:[#allocation5 + $0xc] sm:$0xf]
    %v58 = vld [vmem:[#allocation7] sm:$0x1]
    %v59 = vlaneseq
    %v60 = vshrl.u32 %v59, 7
    %v61 = vsub.s32 0, %v60
    %v62 = vrot.slane %v58, %v61
    %v67 = vunpack.c.l.b16 %v54
    %v68 = vunpack.c.l.b16 %v55
    %v69 = vunpack.c.l.b16 %v56
    %v70 = vunpack.c.l.b16 %v57
    %v71 = vpack.c.b16 %v68, %v67
    %v72 = vpack.c.b16 %v70, %v69
    %vm75 = vcmask 261120
    %v77 = vsel %vm75, %v53, 0
    %79 = vmatprep.subr.bf16.mxu0 0
    %80 = vmatpush1.bf16.msra.mxu0 0
    %81 = vmatprep.subr.bf16.mxu0 0
    %82 = vmatpush1.bf16.msra.mxu0 0
    %83 = vmatprep.subr.bf16.mxu0 0
    %84 = vmatpush1.bf16.msra.mxu0 0
    %85 = vmatprep.subr.bf16.mxu0 0
    %86 = vmatpush1.bf16.msra.mxu0 0
    %87 = vmatprep.subr.bf16.mxu0 0
    %88 = vmatpush1.bf16.msra.mxu0 0
    %89 = vmatprep.subr.bf16.mxu0 0
    %90 = vmatpush1.bf16.msra.mxu0 0
    %91 = vmatprep.subr.bf16.mxu0 0
    %92 = vmatpush1.bf16.msra.mxu0 %v72
    %93 = vmatprep.subr.bf16.mxu0 0
    %94 = vmatpush1.bf16.msra.mxu0 %v71
    %95 = vmatprep.subr.bf16.mxu0 0
    %96 = vmatpush2.bf16.msra.mxu0 0
    %97 = vmatprep.subr.bf16.mxu0 0
    %98 = vmatpush2.bf16.msra.mxu0 0
    %99 = vmatprep.subr.bf16.mxu0 0
    %100 = vmatpush2.bf16.msra.mxu0 0
    %101 = vmatprep.subr.bf16.mxu0 0
    %102 = vmatpush2.bf16.msra.mxu0 0
    %103 = vmatprep.subr.bf16.mxu0 0
    %104 = vmatpush2.bf16.msra.mxu0 0
    %105 = vmatprep.subr.bf16.mxu0 0
    %106 = vmatpush2.bf16.msra.mxu0 0
    %107 = vmatprep.subr.bf16.mxu0 0
    %108 = vmatpush2.bf16.msra.mxu0 0
    %109 = vmatprep.subr.bf16.mxu0 0
    %110 = vmatpush2.bf16.msra.mxu0 0
    %111 = vmatprep.mubr.bf16.mxu0 0
    %112 = vmatmul.mubr.bf16.gmra.mxu0 %v77
    %v113 = vpop.f32.mrf.mxu0
    %v114 = vadd.f32 %v62, %v113
    %v115 = vpop.f32.mrf.mxu0
    %v116 = vpop.f32.mrf.mxu0
    %v117 = vpop.f32.mrf.mxu0
    %118 = vdwg.mxu0
    %v119 = vtanh.pop %v114
    %v120 = vld [vmem:[#allocation5 + $0x10] sm:$0xf]
    %v121 = vld [vmem:[#allocation5 + $0x14] sm:$0xf]
    %v122 = vld [vmem:[#allocation5 + $0x18] sm:$0xf]
    %v123 = vld [vmem:[#allocation5 + $0x1c] sm:$0xf]
    %v124 = vld [vmem:[#allocation5 + $0x20] sm:$0xf]
    %v125 = vld [vmem:[#allocation5 + $0x24] sm:$0xf]
    %v126 = vld [vmem:[#allocation5 + $0x28] sm:$0xf]
    %v127 = vld [vmem:[#allocation5 + $0x2c] sm:$0xf]
    %v128 = vld [vmem:[#allocation5 + $0x30] sm:$0xf]
    %v129 = vld [vmem:[#allocation5 + $0x34] sm:$0xf]
    %v130 = vld [vmem:[#allocation5 + $0x38] sm:$0xf]
    %v131 = vld [vmem:[#allocation5 + $0x3c] sm:$0xf]
    %v132 = vld [vmem:[#allocation5 + $0x40] sm:$0xf]
    %v133 = vld [vmem:[#allocation5 + $0x44] sm:$0xf]
    %v134 = vld [vmem:[#allocation5 + $0x48] sm:$0xf]
    %v135 = vld [vmem:[#allocation5 + $0x4c] sm:$0xf]
    %v136 = vunpack.c.l.bf16 %v120
    %v137 = vunpack.c.l.bf16 %v121
    %v138 = vunpack.c.l.bf16 %v122
    %v139 = vunpack.c.l.bf16 %v123
    %v140 = vunpack.c.l.bf16 %v124
    %v141 = vunpack.c.l.bf16 %v125
    %v142 = vunpack.c.l.bf16 %v126
    %v143 = vunpack.c.l.bf16 %v127
    %v144 = vunpack.c.l.bf16 %v128
    %v145 = vunpack.c.l.bf16 %v129
    %v146 = vunpack.c.l.bf16 %v130
    %v147 = vunpack.c.l.bf16 %v131
    %v148 = vunpack.c.l.bf16 %v132
    %v149 = vunpack.c.l.bf16 %v133
    %v150 = vunpack.c.l.bf16 %v134
    %v151 = vunpack.c.l.bf16 %v135
    %v152 = vld [vmem:[#allocation7 + $0x1] sm:$0x1]
    %v153 = vlaneseq
    %v154 = vshrl.u32 %v153, 7
    %v155 = vsub.s32 0, %v154
    %v156 = vrot.slane %v152, %v155
    %157 = vmatprep.subr.mxu0 0.0
    %158 = vmatpush1.msra.mxu0 %v151
    %159 = vmatprep.subr.mxu0 0.0
    %160 = vmatpush1.msra.mxu0 %v150
    %161 = vmatprep.subr.mxu0 0.0
    %162 = vmatpush1.msra.mxu0 %v149
    %163 = vmatprep.subr.mxu0 0.0
    %164 = vmatpush1.msra.mxu0 %v148
    %165 = vmatprep.subr.mxu0 0.0
    %166 = vmatpush1.msra.mxu0 %v147
    %167 = vmatprep.subr.mxu0 0.0
    %168 = vmatpush1.msra.mxu0 %v146
    %169 = vmatprep.subr.mxu0 0.0
    %170 = vmatpush1.msra.mxu0 %v145
    %171 = vmatprep.subr.mxu0 0.0
    %172 = vmatpush1.msra.mxu0 %v144
    %173 = vmatprep.subr.mxu0 0.0
    %174 = vmatpush1.msra.mxu0 %v143
    %175 = vmatprep.subr.mxu0 0.0
    %176 = vmatpush1.msra.mxu0 %v142
    %177 = vmatprep.subr.mxu0 0.0
    %178 = vmatpush1.msra.mxu0 %v141
    %179 = vmatprep.subr.mxu0 0.0
    %180 = vmatpush1.msra.mxu0 %v140
    %181 = vmatprep.subr.mxu0 0.0
    %182 = vmatpush1.msra.mxu0 %v139
    %183 = vmatprep.subr.mxu0 0.0
    %184 = vmatpush1.msra.mxu0 %v138
    %185 = vmatprep.subr.mxu0 0.0
    %186 = vmatpush1.msra.mxu0 %v137
    %187 = vmatprep.subr.mxu0 0.0
    %188 = vmatpush1.msra.mxu0 %v136
    %189 = vmatprep.subr.mxu0 0.0
    %190 = vmatpush2.msra.mxu0 0.0
    %191 = vmatprep.subr.mxu0 0.0
    %192 = vmatpush2.msra.mxu0 0.0
    %193 = vmatprep.subr.mxu0 0.0
    %194 = vmatpush2.msra.mxu0 0.0
    %195 = vmatprep.subr.mxu0 0.0
    %196 = vmatpush2.msra.mxu0 0.0
    %197 = vmatprep.subr.mxu0 0.0
    %198 = vmatpush2.msra.mxu0 0.0
    %199 = vmatprep.subr.mxu0 0.0
    %200 = vmatpush2.msra.mxu0 0.0
    %201 = vmatprep.subr.mxu0 0.0
    %202 = vmatpush2.msra.mxu0 0.0
    %203 = vmatprep.subr.mxu0 0.0
    %204 = vmatpush2.msra.mxu0 0.0
    %205 = vmatprep.subr.mxu0 0.0
    %206 = vmatpush2.msra.mxu0 0.0
    %207 = vmatprep.subr.mxu0 0.0
    %208 = vmatpush2.msra.mxu0 0.0
    %209 = vmatprep.subr.mxu0 0.0
    %210 = vmatpush2.msra.mxu0 0.0
    %211 = vmatprep.subr.mxu0 0.0
    %212 = vmatpush2.msra.mxu0 0.0
    %213 = vmatprep.subr.mxu0 0.0
    %214 = vmatpush2.msra.mxu0 0.0
    %215 = vmatprep.subr.mxu0 0.0
    %216 = vmatpush2.msra.mxu0 0.0
    %217 = vmatprep.subr.mxu0 0.0
    %218 = vmatpush2.msra.mxu0 0.0
    %219 = vmatprep.subr.mxu0 0.0
    %220 = vmatpush2.msra.mxu0 0.0
    %221 = vmatprep.mubr.f32.mxu0 0.0
    %222 = vmatmul.mubr.f32.gmra.mxu0 %v119
    %v223 = vpop.f32.mrf.mxu0
    %v224 = vadd.f32 %v156, %v223
    %v225 = vpop.f32.mrf.mxu0
    %226 = vdwg.mxu0
    %v227 = vtanh.pop %v224
    %v228 = vld [vmem:[#allocation7 + $0x2] sm:$0x1]
    %v229 = vlaneseq
    %v230 = vshrl.u32 %v229, 7
    %v231 = vsub.s32 0, %v230
    %v232 = vrot.slane %v228, %v231
    %v233 = vmul.f32 %v227, %v232
    %234 = vadd.xlane.f32.xlu0 %v233
    %v235 = vpop.xlane.xlu0 %234
    %v236 = vld [vmem:[#allocation7 + $0x3] sm:$0x1]
    %v237 = vlaneseq
    %v238 = vshrl.u32 %v237, 7
    %v239 = vsub.s32 0, %v238
    %v240 = vrot.slane %v236, %v239
    %v241 = vadd.f32 %v235, %v240
    %v242 = vlaneseq
    %v243 = vand.u32 %v242, 127
    %vm244 = vcmp.lt.s32.totalorder %v243, 64
    %v245 = vsel %vm244, 1, 0
    %vm246 = vcmp.eq.s32.totalorder %v245, 1
    %248 = vset.pattern.permute.xlu0 0
    %249 = vperm.xlu0 %248, %v241
    %v250 = vpop.permute.xlu0 %249
    %v252 = vsel %vm246, %v227, %v250
    %v253 = vpack.c.bf16 %v252, %v252
    %254 = vst [vmem:[#allocation8] sm:$0xf] %v253
    // Predicated region
    $region26: #{tpu_custom_call.1} parent=1 // pred_check
      _
    $region27: #{tpu_custom_call.1} parent=1 // pred_check_branch
      %256 = sbr.rel (0) target = $region29
    $region28: #{tpu_custom_call.1} parent=1 // pred_region
      %s258 = ssub.s32 64, 64
      %259 = vsyncadd [#allocation4], %s258
      %s261 = sshll.u32 [#allocation8], 4
      %s262 = int_to_ptr.vmem [resolvable:$true] %s261
      %264 = dma.vmem_to_hbm [thread:$0]  %s262, 64, %s3, [#allocation4]
    $region29: #{tpu_custom_call.1} parent=1 // pred_fallthru
      _
    // Predicated region
    $region30: #{tpu_custom_call.1} parent=1 // pred_check
      _
    $region31: #{tpu_custom_call.1} parent=1 // pred_check_branch
      %266 = sbr.rel (0) target = $region33
    $region32: #{tpu_custom_call.1} parent=1 // pred_region
      %267 = dma.done [#allocation4], 64
    $region33: #{tpu_custom_call.1} parent=1 // pred_fallthru
      _
    %268 = vsyncpa [#allocation3], 1
    %269 = vsyncpa [#allocation6], 1
    %270 = vsyncpa [#allocation4], 1

</llo_original>
